<compile_context>
chip_gen: v7x
topology: tpu7x:2x2x1
jax: 0.10.0
libtpu: 0.0.40
codegen_flags: <defaults>
</compile_context>

<pallas_src>
import functools

import jax
import jax.numpy as jnp
from jax.experimental import pallas as pl
from jax.experimental.pallas import tpu as pltpu


def _combined_loss_kernel(pred_ref, true_ref, stats_ref, *, S, TS, TP, needs_mask):
    # pred_ref : (1, C, TS)  logits tile, native dtype (bf16/f32)
    # true_ref : (1, 1, TS)  label tile (any int or float dtype; cast in-kernel)
    # stats_ref: (1, C, 4)   f32 accumulator: [nll_sum, count, inter, soft_sum]
    x_nat = pred_ref[0]                               # (C, TS) native dtype
    labels = true_ref[0].astype(jnp.int32)            # (1, TS); trunc toward zero == torch .long()
    C = x_nat.shape[0]

    # Numerically stable softmax / log-softmax along the class (sublane) axis.
    # Max in native dtype (exact), cast folded into the subtraction.
    m = jnp.max(x_nat, axis=0, keepdims=True)                         # (1, TS)
    z = x_nat.astype(jnp.float32) - m.astype(jnp.float32)             # (C, TS) f32
    ez = jnp.exp(z)                                                   # EUP slot
    sez = jnp.sum(ez, axis=0, keepdims=True)                          # (1, TS)
    inv = pl.reciprocal(sez)          # exact (approx=False) -> keeps 1e-5 vs reference
    soft = ez * inv                                                   # (C, TS) softmax
    lse = jnp.log(sez)                                                # (1, TS); -log p[c] = lse - z[c]

    if needs_mask:
        # Tail / over-provisioned-tile masking: global lane index >= S is invalid.
        tile = pl.program_id(1) * TP + pl.program_id(2)               # unclamped global tile idx
        lane = jax.lax.broadcasted_iota(jnp.int32, (1, TS), 1)
        lane_valid = (tile * TS + lane) < S                           # (1, TS) bool
        # Folding validity into the labels lets `sel` mask CE / count / inter for free.
        labels = jnp.where(lane_valid, labels, -1)

    cls = jax.lax.broadcasted_iota(jnp.int32, (C, TS), 0)
    sel = cls == labels                                               # (C, TS) bool one-hot

    # Per-class partial reductions over this tile.  Selects feed the reductions
    # directly (no materialized f32 one-hot / logp temporaries).
    nll_sum = jnp.sum(jnp.where(sel, lse - z, 0.0), axis=1, keepdims=True)   # (C, 1)
    count = jnp.sum(jnp.where(sel, 1.0, 0.0), axis=1, keepdims=True)         # (C, 1)
    inter = jnp.sum(jnp.where(sel, soft, 0.0), axis=1, keepdims=True)        # (C, 1)
    if needs_mask:
        soft_sum = jnp.sum(jnp.where(lane_valid, soft, 0.0), axis=1, keepdims=True)
    else:
        soft_sum = jnp.sum(soft, axis=1, keepdims=True)                      # (C, 1)
    # (dice union = count + soft_sum, reconstructed in the JAX combine)

    # Accumulate across spatial tiles; the output block is VMEM-resident across
    # the innermost ("arbitrary") grid axis and written back once per (b, p).
    @pl.when(pl.program_id(2) == 0)
    def _():
        stats_ref[...] = jnp.zeros_like(stats_ref)

    stats_ref[0, :, 0:1] += nll_sum
    stats_ref[0, :, 1:2] += count
    stats_ref[0, :, 2:3] += inter
    stats_ref[0, :, 3:4] += soft_sum


def _pick_spatial_tile(S, C, pred_dtype, *, max_lanes=16384, vmem_budget_bytes=8 << 20):
    """VMEM-budgeted lanes-per-tile (multiple of 128), independent of image size."""
    itemsize = jnp.dtype(pred_dtype).itemsize
    sub_mult = {4: 8, 2: 16, 1: 32}.get(itemsize, 8)
    c_pad = -(-C // sub_mult) * sub_mult
    # per-lane bytes: double-buffered logits tile + double-buffered label tile
    # (>=8 sublanes of 32-bit equivalent) + ~8 live f32 (C, TS) temporaries.
    per_lane = 2 * c_pad * itemsize + 2 * 8 * 4 + 8 * C * 4
    ts = min(max_lanes, vmem_budget_bytes // per_lane)
    ts = max(128, (ts // 128) * 128)
    s_pad = -(-S // 128) * 128
    return min(ts, s_pad)


def multiclass_combined_loss(y_pred, y_true, ce_weight=None, dice_smooth=1e-5,
                             num_partials=2):
    """y_pred: [B, C, H, W] logits (any float dtype, bf16 kept as bf16).
    y_true: [B, 1, H, W] labels (int8/int16/int32 preferred to cut HBM bytes;
    float accepted, truncated toward zero in-kernel like torch .long())."""
    B, C, H, W = y_pred.shape
    assert y_true.shape == (B, 1, H, W), "y_true must be [B,1,H,W]"
    S = H * W

    pred = y_pred.reshape(B, C, S)      # native dtype -> minimal DMA bytes
    true = y_true.reshape(B, 1, S)      # no wrapper-side cast pass; cast on-tile in-kernel

    if ce_weight is None:
        w = jnp.ones((C,), jnp.float32)
    else:
        w = jnp.asarray(ce_weight, jnp.float32)
        assert w.shape == (C,)

    TS = _pick_spatial_tile(S, C, pred.dtype)
    T = pl.cdiv(S, TS)                      # total spatial tiles
    P = max(1, int(num_partials))           # parallel spatial partials (2 TCs on v7x)
    TP = pl.cdiv(T, P)                      # tiles per partial
    needs_mask = (P * TP * TS) != S         # static: any OOB / duplicated lanes?

    kernel = functools.partial(_combined_loss_kernel, S=S, TS=TS, TP=TP,
                               needs_mask=needs_mask)

    def tile_idx(b, p, k):
        # clamp so the block index is always in-bounds; lane masking zeroes the excess
        return (b, 0, jnp.minimum(p * TP + k, T - 1))

    grid_spec = pltpu.PrefetchScalarGridSpec(
        num_scalar_prefetch=0,
        grid=(B, P, TP),
        in_specs=[
            pl.BlockSpec((1, C, TS), tile_idx),    # logits tile
            pl.BlockSpec((1, 1, TS), tile_idx),    # label tile
        ],
        out_specs=pl.BlockSpec((1, C, 4), lambda b, p, k: (b * P + p, 0, 0)),
    )

    stats = pl.pallas_call(
        kernel,
        out_shape=jax.ShapeDtypeStruct((B * P, C, 4), jnp.float32),
        grid_spec=grid_spec,
        compiler_params=pltpu.CompilerParams(
            # batch and spatial-partial axes parallel; spatial reduction axis arbitrary
            dimension_semantics=("parallel", "parallel", "arbitrary"),
            vmem_limit_bytes=32 * 1024 * 1024),
    )(pred, true)

    # Tiny O(B*P*C) combine (glue): merge partials, apply class weights, CE + Dice.
    stats = stats.reshape(B, P, C, 4).sum(axis=1)      # (B, C, 4)
    nll_sum = stats[:, :, 0]
    count = stats[:, :, 1]
    inter = stats[:, :, 2]
    soft_sum = stats[:, :, 3]

    ce = jnp.sum(nll_sum * w[None, :]) / jnp.sum(count * w[None, :])   # weighted CE (mean)
    union = count + soft_sum
    dice = (2.0 * inter + dice_smooth) / (union + dice_smooth)
    return ce + (1.0 - jnp.mean(dice))


def _reference_loss(y_pred, y_true, ce_weight, dice_smooth=1e-5):
    """Pure-JAX reference mirroring the PyTorch module, for a sanity check."""
    B, C, H, W = y_pred.shape
    labels = y_true.reshape(B, H, W).astype(jnp.int32)
    yp = y_pred.astype(jnp.float32)
    logp = jax.nn.log_softmax(yp, axis=1)
    soft = jax.nn.softmax(yp, axis=1)
    onehot = jax.nn.one_hot(labels, C, dtype=jnp.float32).transpose(0, 3, 1, 2)
    w = jnp.asarray(ce_weight, jnp.float32)
    w_pix = w[labels]                                   # (B,H,W)
    nll = -jnp.sum(onehot * logp, axis=1)               # (B,H,W)
    ce = jnp.sum(w_pix * nll) / jnp.sum(w_pix)
    inter = jnp.sum(onehot * soft, axis=(2, 3))
    union = jnp.sum(onehot + soft, axis=(2, 3))
    dice = (2.0 * inter + dice_smooth) / (union + dice_smooth)
    return ce + (1.0 - jnp.mean(dice))


if __name__ == "__main__":
    key = jax.random.PRNGKey(0)
    k1, k2 = jax.random.split(key)

    # H*W = 400 is deliberately NOT a multiple of 128 so the cdiv + tail-masking
    # path (and the clamped fully-masked partial tile) is exercised.
    B, C, H, W = 2, 8, 20, 20
    y_pred = jax.random.normal(k1, (B, C, H, W), dtype=jnp.float32)
    y_true = jax.random.randint(k2, (B, 1, H, W), 0, C)   # int32 labels (int8 also supported)

    # Deterministic, non-uniform CE class weights (num_classes = 8).
    ce_weight = jnp.array([1.0, 0.5, 2.0, 1.5, 1.0, 0.8, 1.2, 0.6], jnp.float32)

    loss = multiclass_combined_loss(y_pred, y_true, ce_weight=ce_weight)
    loss = jax.block_until_ready(loss)

    ref = _reference_loss(y_pred, y_true, ce_weight)
    assert jnp.allclose(loss, ref, rtol=1e-5, atol=1e-5), (loss, ref)

    print("KERNEL_OK")
</pallas_src>

<mosaic_0001>
module attributes {stable_mosaic.version = 11 : i64} {
  func.func @_combined_loss_kernel(%arg0: i32, %arg1: i32, %arg2: i32, %arg3: memref<1x8x512xf32, #tpu.memory_space<vmem>>, %arg4: memref<1x1x512xi32, #tpu.memory_space<vmem>>, %arg5: memref<1x8x4xf32, #tpu.memory_space<vmem>>) attributes {dimension_semantics = [#tpu.dimension_semantics<parallel>, #tpu.dimension_semantics<parallel>, #tpu.dimension_semantics<arbitrary>], iteration_bounds = array<i64: 2, 2, 1>, scalar_prefetch = 0 : i64, scratch_operands = 0 : i64, tpu.core_type = #tpu.core_type<tc>, window_params = [{transform_indices = @transform_0, window_bounds = array<i64: 1, 8, 512>}, {transform_indices = @transform_1, window_bounds = array<i64: 1, 1, 512>}, {transform_indices = @transform_2, window_bounds = array<i64: 1, 8, 4>}]} {
    %c0 = arith.constant 0 : index
    %c0_0 = arith.constant 0 : index
    %c0_1 = arith.constant 0 : index
    %0 = vector.load %arg3[%c0, %c0_0, %c0_1] : memref<1x8x512xf32, #tpu.memory_space<vmem>>, vector<1x8x512xf32>
    %1 = vector.shape_cast %0 : vector<1x8x512xf32> to vector<8x512xf32>
    %c0_2 = arith.constant 0 : index
    %c0_3 = arith.constant 0 : index
    %c0_4 = arith.constant 0 : index
    %2 = vector.load %arg4[%c0_2, %c0_3, %c0_4] : memref<1x1x512xi32, #tpu.memory_space<vmem>>, vector<1x1x512xi32>
    %3 = vector.shape_cast %2 : vector<1x1x512xi32> to vector<1x512xi32>
    %cst = arith.constant dense<0xFF800000> : vector<512xf32>
    %4 = vector.multi_reduction <maximumf>, %1, %cst [0] : vector<8x512xf32> to vector<512xf32>
    %5 = vector.shape_cast %4 : vector<512xf32> to vector<1x512xf32>
    %6 = vector.broadcast %5 : vector<1x512xf32> to vector<8x512xf32>
    %7 = arith.subf %1, %6 : vector<8x512xf32>
    %8 = math.exp %7 : vector<8x512xf32>
    %cst_5 = arith.constant dense<0.000000e+00> : vector<512xf32>
    %9 = vector.multi_reduction <add>, %8, %cst_5 [0] : vector<8x512xf32> to vector<512xf32>
    %10 = vector.shape_cast %9 : vector<512xf32> to vector<1x512xf32>
    %11 = tpu.reciprocal %10 : vector<1x512xf32> -> vector<1x512xf32>
    %12 = vector.broadcast %11 : vector<1x512xf32> to vector<8x512xf32>
    %13 = arith.mulf %8, %12 : vector<8x512xf32>
    %14 = math.log %10 : vector<1x512xf32>
    %c1_i32 = arith.constant 1 : i32
    %15 = arith.muli %arg1, %c1_i32 : i32
    %16 = arith.addi %15, %arg2 : i32
    %17 = tpu.iota {dimensions = array<i32: 1>} : vector<1x512xi32>
    %c512_i32 = arith.constant 512 : i32
    %18 = arith.muli %16, %c512_i32 : i32
    %19 = vector.broadcast %18 : i32 to vector<1x512xi32>
    %20 = arith.addi %19, %17 : vector<1x512xi32>
    %c400_i32 = arith.constant 400 : i32
    %21 = vector.broadcast %c400_i32 : i32 to vector<1x512xi32>
    %22 = arith.cmpi slt, %20, %21 : vector<1x512xi32>
    %c-1_i32 = arith.constant -1 : i32
    %23 = vector.broadcast %c-1_i32 : i32 to vector<1x512xi32>
    %24 = arith.select %22, %3, %23 : vector<1x512xi1>, vector<1x512xi32>
    %25 = tpu.iota {dimensions = array<i32: 0>} : vector<8x512xi32>
    %26 = vector.broadcast %24 : vector<1x512xi32> to vector<8x512xi32>
    %27 = arith.cmpi eq, %25, %26 : vector<8x512xi32>
    %28 = vector.broadcast %14 : vector<1x512xf32> to vector<8x512xf32>
    %29 = arith.subf %28, %7 : vector<8x512xf32>
    %cst_6 = arith.constant 0.000000e+00 : f32
    %30 = vector.broadcast %cst_6 : f32 to vector<8x512xf32>
    %31 = arith.select %27, %29, %30 : vector<8x512xi1>, vector<8x512xf32>
    %cst_7 = arith.constant dense<0.000000e+00> : vector<8xf32>
    %32 = vector.multi_reduction <add>, %31, %cst_7 [1] : vector<8x512xf32> to vector<8xf32>
    %33 = vector.shape_cast %32 : vector<8xf32> to vector<8x1xf32>
    %cst_8 = arith.constant 1.000000e+00 : f32
    %cst_9 = arith.constant 0.000000e+00 : f32
    %34 = vector.broadcast %cst_8 : f32 to vector<8x512xf32>
    %35 = vector.broadcast %cst_9 : f32 to vector<8x512xf32>
    %36 = arith.select %27, %34, %35 : vector<8x512xi1>, vector<8x512xf32>
    %cst_10 = arith.constant dense<0.000000e+00> : vector<8xf32>
    %37 = vector.multi_reduction <add>, %36, %cst_10 [1] : vector<8x512xf32> to vector<8xf32>
    %38 = vector.shape_cast %37 : vector<8xf32> to vector<8x1xf32>
    %cst_11 = arith.constant 0.000000e+00 : f32
    %39 = vector.broadcast %cst_11 : f32 to vector<8x512xf32>
    %40 = arith.select %27, %13, %39 : vector<8x512xi1>, vector<8x512xf32>
    %cst_12 = arith.constant dense<0.000000e+00> : vector<8xf32>
    %41 = vector.multi_reduction <add>, %40, %cst_12 [1] : vector<8x512xf32> to vector<8xf32>
    %42 = vector.shape_cast %41 : vector<8xf32> to vector<8x1xf32>
    %cst_13 = arith.constant 0.000000e+00 : f32
    %43 = vector.shape_cast %22 : vector<1x512xi1> to vector<1x512xi1>
    %44 = vector.broadcast %43 : vector<1x512xi1> to vector<8x512xi1>
    %45 = vector.broadcast %cst_13 : f32 to vector<8x512xf32>
    %46 = arith.select %44, %13, %45 : vector<8x512xi1>, vector<8x512xf32>
    %cst_14 = arith.constant dense<0.000000e+00> : vector<8xf32>
    %47 = vector.multi_reduction <add>, %46, %cst_14 [1] : vector<8x512xf32> to vector<8xf32>
    %48 = vector.shape_cast %47 : vector<8xf32> to vector<8x1xf32>
    %c0_i32 = arith.constant 0 : i32
    %49 = arith.cmpi eq, %arg2, %c0_i32 : i32
    %50 = arith.extui %49 : i1 to i32
    %c0_i32_15 = arith.constant 0 : i32
    %51 = arith.cmpi ne, %50, %c0_i32_15 : i32
    scf.if %51 {
      %cst_37 = arith.constant 0.000000e+00 : f32
      %76 = vector.broadcast %cst_37 : f32 to vector<1x8x4xf32>
      %c0_38 = arith.constant 0 : index
      %c0_39 = arith.constant 0 : index
      %c0_40 = arith.constant 0 : index
      %77 = vector.load %arg5[%c0_38, %c0_39, %c0_40] : memref<1x8x4xf32, #tpu.memory_space<vmem>>, vector<1x8x4xf32>
      tpu.vector_store %arg5[%c0_38, %c0_39, %c0_40], %76 {strides = array<i32>} : memref<1x8x4xf32, #tpu.memory_space<vmem>>, vector<1x8x4xf32>,
    } else {
    }
    %c0_16 = arith.constant 0 : index
    %c0_17 = arith.constant 0 : index
    %c0_18 = arith.constant 0 : index
    %52 = vector.load %arg5[%c0_16, %c0_17, %c0_18] : memref<1x8x4xf32, #tpu.memory_space<vmem>>, vector<1x8x1xf32>
    %53 = vector.shape_cast %52 : vector<1x8x1xf32> to vector<8x1xf32>
    %54 = arith.addf %53, %33 : vector<8x1xf32>
    %c0_19 = arith.constant 0 : index
    %c0_20 = arith.constant 0 : index
    %c0_21 = arith.constant 0 : index
    %55 = vector.load %arg5[%c0_19, %c0_20, %c0_21] : memref<1x8x4xf32, #tpu.memory_space<vmem>>, vector<1x8x1xf32>
    %56 = vector.shape_cast %55 : vector<1x8x1xf32> to vector<8x1xf32>
    %57 = vector.shape_cast %54 : vector<8x1xf32> to vector<1x8x1xf32>
    tpu.vector_store %arg5[%c0_19, %c0_20, %c0_21], %57 {strides = array<i32>} : memref<1x8x4xf32, #tpu.memory_space<vmem>>, vector<1x8x1xf32>,
    %c0_22 = arith.constant 0 : index
    %c0_23 = arith.constant 0 : index
    %c1 = arith.constant 1 : index
    %58 = vector.load %arg5[%c0_22, %c0_23, %c1] : memref<1x8x4xf32, #tpu.memory_space<vmem>>, vector<1x8x1xf32>
    %59 = vector.shape_cast %58 : vector<1x8x1xf32> to vector<8x1xf32>
    %60 = arith.addf %59, %38 : vector<8x1xf32>
    %c0_24 = arith.constant 0 : index
    %c0_25 = arith.constant 0 : index
    %c1_26 = arith.constant 1 : index
    %61 = vector.load %arg5[%c0_24, %c0_25, %c1_26] : memref<1x8x4xf32, #tpu.memory_space<vmem>>, vector<1x8x1xf32>
    %62 = vector.shape_cast %61 : vector<1x8x1xf32> to vector<8x1xf32>
    %63 = vector.shape_cast %60 : vector<8x1xf32> to vector<1x8x1xf32>
    tpu.vector_store %arg5[%c0_24, %c0_25, %c1_26], %63 {strides = array<i32>} : memref<1x8x4xf32, #tpu.memory_space<vmem>>, vector<1x8x1xf32>,
    %c0_27 = arith.constant 0 : index
    %c0_28 = arith.constant 0 : index
    %c2 = arith.constant 2 : index
    %64 = vector.load %arg5[%c0_27, %c0_28, %c2] : memref<1x8x4xf32, #tpu.memory_space<vmem>>, vector<1x8x1xf32>
    %65 = vector.shape_cast %64 : vector<1x8x1xf32> to vector<8x1xf32>
    %66 = arith.addf %65, %42 : vector<8x1xf32>
    %c0_29 = arith.constant 0 : index
    %c0_30 = arith.constant 0 : index
    %c2_31 = arith.constant 2 : index
    %67 = vector.load %arg5[%c0_29, %c0_30, %c2_31] : memref<1x8x4xf32, #tpu.memory_space<vmem>>, vector<1x8x1xf32>
    %68 = vector.shape_cast %67 : vector<1x8x1xf32> to vector<8x1xf32>
    %69 = vector.shape_cast %66 : vector<8x1xf32> to vector<1x8x1xf32>
    tpu.vector_store %arg5[%c0_29, %c0_30, %c2_31], %69 {strides = array<i32>} : memref<1x8x4xf32, #tpu.memory_space<vmem>>, vector<1x8x1xf32>,
    %c0_32 = arith.constant 0 : index
    %c0_33 = arith.constant 0 : index
    %c3 = arith.constant 3 : index
    %70 = vector.load %arg5[%c0_32, %c0_33, %c3] : memref<1x8x4xf32, #tpu.memory_space<vmem>>, vector<1x8x1xf32>
    %71 = vector.shape_cast %70 : vector<1x8x1xf32> to vector<8x1xf32>
    %72 = arith.addf %71, %48 : vector<8x1xf32>
    %c0_34 = arith.constant 0 : index
    %c0_35 = arith.constant 0 : index
    %c3_36 = arith.constant 3 : index
    %73 = vector.load %arg5[%c0_34, %c0_35, %c3_36] : memref<1x8x4xf32, #tpu.memory_space<vmem>>, vector<1x8x1xf32>
    %74 = vector.shape_cast %73 : vector<1x8x1xf32> to vector<8x1xf32>
    %75 = vector.shape_cast %72 : vector<8x1xf32> to vector<1x8x1xf32>
    tpu.vector_store %arg5[%c0_34, %c0_35, %c3_36], %75 {strides = array<i32>} : memref<1x8x4xf32, #tpu.memory_space<vmem>>, vector<1x8x1xf32>,
    return
  }
  func.func @transform_0(%arg0: i32, %arg1: i32, %arg2: i32) -> (i32, i32, i32) {
    %c1_i32 = arith.constant 1 : i32
    %0 = arith.muli %arg1, %c1_i32 : i32
    %1 = arith.addi %0, %arg2 : i32
    %c0_i32 = arith.constant 0 : i32
    %2 = arith.minsi %1, %c0_i32 : i32
    %c0_i32_0 = arith.constant 0 : i32
    %c0_i32_1 = arith.constant 0 : i32
    return %arg0, %c0_i32_0, %2 : i32, i32, i32
  }
  func.func @transform_1(%arg0: i32, %arg1: i32, %arg2: i32) -> (i32, i32, i32) {
    %c1_i32 = arith.constant 1 : i32
    %0 = arith.muli %arg1, %c1_i32 : i32
    %1 = arith.addi %0, %arg2 : i32
    %c0_i32 = arith.constant 0 : i32
    %2 = arith.minsi %1, %c0_i32 : i32
    %c0_i32_0 = arith.constant 0 : i32
    %c0_i32_1 = arith.constant 0 : i32
    return %arg0, %c0_i32_0, %2 : i32, i32, i32
  }
  func.func @transform_2(%arg0: i32, %arg1: i32, %arg2: i32) -> (i32, i32, i32) {
    %c2_i32 = arith.constant 2 : i32
    %0 = arith.muli %arg0, %c2_i32 : i32
    %1 = arith.addi %0, %arg1 : i32
    %c0_i32 = arith.constant 0 : i32
    %c0_i32_0 = arith.constant 0 : i32
    %c0_i32_1 = arith.constant 0 : i32
    return %1, %c0_i32, %c0_i32_0 : i32, i32, i32
  }
}

</mosaic_0001>

<llo_original>
// kernel: tpu_custom_call.1
$region0: #{tpu_custom_call.1}
  #allocation0 [shape = 'u32[]', space=smem, size = 0x4, offset = 0x4, fixed_abs, tag = 'smem constant byte address 0x4 - core index']
  #allocation1 [shape = 'u32[144,128]{1,0:T(1,128)}', space=vmem, size = 0x12000, scoped, tag = 'internal scratch']
  %s0 = inlined_call_operand.hbm [shape: f32[2,8,400], index: 0, kind: input, shape index: {}]
  %s1 = inlined_call_operand.hbm [shape: s32[2,1,400], index: 1, kind: input, shape index: {}]
  %s2 = inlined_call_operand.vmem [shape: f32[4,8,4], index: 2, kind: output, shape index: {}]
  %s3 = sld [smem:[#allocation0]]
  $region53: #{tpu_custom_call.1} parent=0
    _
  %s5 = ssub.s32 1, %s3
  %s6 = scalar_select 0, %s5, %s3
  $region1: #{tpu_custom_call.1} parent=0
    #allocation2 [shape = 'u8[32768]{0}', space=vmem, size = 0x8000, scoped, tag = 'input window, operand 0']
    #allocation3 [shape = 's32[2]{0}', space=sflag, size = 0x8, scoped, tag = 'scoped memory for tpu_custom_call.1']
    #allocation4 [shape = 'u8[4096]{0}', space=vmem, size = 0x1000, scoped, tag = 'input window, operand 1']
    #allocation5 [shape = 's32[2]{0}', space=sflag, size = 0x8, scoped, tag = 'scoped memory for tpu_custom_call.1']
    %7 = vsyncpa [#allocation3], 0
    %s8 = scalar_lea.sflag [#allocation3], 1
    %9 = vsyncpa %s8, 0
    %10 = vsyncpa [#allocation5], 0
    %s11 = scalar_lea.sflag [#allocation5], 1
    %12 = vsyncpa %s11, 0
    loop: start=0, step=1, limit=6
    $region2: #{tpu_custom_call.1} parent=1 // loop_pre_header
      _
    $region3: #{tpu_custom_call.1} parent=1 // loop_header
      %s14 = sphi 0, %s18
      %p15 = scmp.ge.s32.totalorder %s14, 6
      %s21 = sphi 0, %s40
      %s22 = sphi 0, %s36
      %s23 = sphi 0, %s32
      %s24 = sphi 0, %s21
      %s25 = sphi 0, %s22
      %s26 = sphi 0, %s23
      %s27 = sphi 0, %s24
      %s28 = sphi 0, %s25
      %s29 = sphi 0, %s26
      %s51 = sphi 0, %s53
      %s54 = sphi 0, %s51
      %s55 = sphi 0, %s54
      %s71 = sphi 0, %s55
      %s85 = sphi 0, %s87
      %s88 = sphi 0, %s85
      %s89 = sphi 0, %s88
      %s105 = sphi 0, %s89
      %s115 = sphi 0, %s117
      %s118 = sphi 0, %s115
      %s119 = sphi 0, %s118
      %s135 = sphi 0, %s119
    $region4: #{tpu_custom_call.1} parent=1 // loop_header_branch
      %17 = sbr.rel (%p15) target = $region8
    $region5: #{tpu_custom_call.1} parent=1 // loop_body
      %s19 = ssub.s32 %s14, 1
      %s20 = ssub.s32 %s14, 2
      %s30 = sadd.s32 1, %s23
      %p31 = scmp.ge.s32.totalorder %s30, 1
      %s32 = scalar_select %p31, 0, %s30
      %s33 = sadd.s32 1, %s22
      %s34 = scalar_select %p31, %s33, %s22
      %p35 = scmp.ge.s32.totalorder %s34, 2
      %s36 = scalar_select %p35, 0, %s34
      %s37 = sadd.s32 1, %s21
      %s38 = scalar_select %p35, %s37, %s21
      %p39 = scmp.ge.s32.totalorder %s38, 2
      %s40 = scalar_select %p39, 0, %s38
      %s41 = sadd.s32 %s22, %s23
      %p42 = scmp.lt.s32.totalorder %s41, 0
      %s43 = scalar_select %p42, %s41, 0
      %s44 = sadd.s32 %s36, %s32
      %p45 = scmp.lt.s32.totalorder %s44, 0
      %s46 = scalar_select %p45, %s44, 0
      %s47 = ssub.s32 %s21, %s40
      %s48 = ssub.s32 %s43, %s46
      %s49 = sor.u32 %s47, %s48
      %p50 = scmp.eq.s32.totalorder %s49, 0
      %s52 = sadd.s32 %s51, 1
      %s53 = scalar_select %p50, %s51, %s52
      %p56 = pneg %p50
      %p57 = scmp.eq.s32.totalorder %s14, 3
      %p58 = por %p56, %p57
      %p59 = scmp.ne.s32.totalorder %s51, %s54
      %p60 = scmp.eq.s32.totalorder %s14, 0
      %p61 = por %p59, %p60
      %p62 = scmp.ne.s32.totalorder %s51, %s54
      %p63 = scmp.eq.s32.totalorder %s19, 3
      %p64 = por %p62, %p63
      %p65 = scmp.ne.s32.totalorder %s54, %s55
      %p66 = scmp.eq.s32.totalorder %s19, 0
      %p67 = por %p65, %p66
      %p68 = scmp.ne.s32.totalorder %s54, %s55
      %p69 = scmp.eq.s32.totalorder %s20, 3
      %p70 = por %p68, %p69
      %p72 = scmp.ne.s32.totalorder %s55, %s71
      %p73 = scmp.eq.s32.totalorder %s20, 0
      %p74 = por %p72, %p73
      %s75 = sadd.s32 %s22, %s23
      %p76 = scmp.lt.s32.totalorder %s75, 0
      %s77 = scalar_select %p76, %s75, 0
      %s78 = sadd.s32 %s36, %s32
      %p79 = scmp.lt.s32.totalorder %s78, 0
      %s80 = scalar_select %p79, %s78, 0
      %s81 = ssub.s32 %s21, %s40
      %s82 = ssub.s32 %s77, %s80
      %s83 = sor.u32 %s81, %s82
      %p84 = scmp.eq.s32.totalorder %s83, 0
      %s86 = sadd.s32 %s85, 1
      %s87 = scalar_select %p84, %s85, %s86
      %p90 = pneg %p84
      %p91 = scmp.eq.s32.totalorder %s14, 3
      %p92 = por %p90, %p91
      %p93 = scmp.ne.s32.totalorder %s85, %s88
      %p94 = scmp.eq.s32.totalorder %s14, 0
      %p95 = por %p93, %p94
      %p96 = scmp.ne.s32.totalorder %s85, %s88
      %p97 = scmp.eq.s32.totalorder %s19, 3
      %p98 = por %p96, %p97
      %p99 = scmp.ne.s32.totalorder %s88, %s89
      %p100 = scmp.eq.s32.totalorder %s19, 0
      %p101 = por %p99, %p100
      %p102 = scmp.ne.s32.totalorder %s88, %s89
      %p103 = scmp.eq.s32.totalorder %s20, 3
      %p104 = por %p102, %p103
      %p106 = scmp.ne.s32.totalorder %s89, %s105
      %p107 = scmp.eq.s32.totalorder %s20, 0
      %p108 = por %p106, %p107
      %s109 = smul.u32 %s21, 2
      %s110 = sadd.s32 %s109, %s22
      %s111 = smul.u32 %s40, 2
      %s112 = sadd.s32 %s111, %s36
      %s113 = ssub.s32 %s110, %s112
      %p114 = scmp.eq.s32.totalorder %s113, 0
      %s116 = sadd.s32 %s115, 1
      %s117 = scalar_select %p114, %s115, %s116
      %p120 = pneg %p114
      %p121 = scmp.eq.s32.totalorder %s14, 3
      %p122 = por %p120, %p121
      %p123 = scmp.ne.s32.totalorder %s115, %s118
      %p124 = scmp.eq.s32.totalorder %s14, 0
      %p125 = por %p123, %p124
      %p126 = scmp.ne.s32.totalorder %s115, %s118
      %p127 = scmp.eq.s32.totalorder %s19, 3
      %p128 = por %p126, %p127
      %p129 = scmp.ne.s32.totalorder %s118, %s119
      %p130 = scmp.eq.s32.totalorder %s19, 0
      %p131 = por %p129, %p130
      %p132 = scmp.ne.s32.totalorder %s118, %s119
      %p133 = scmp.eq.s32.totalorder %s20, 3
      %p134 = por %p132, %p133
      %p136 = scmp.ne.s32.totalorder %s119, %s135
      %p137 = scmp.eq.s32.totalorder %s20, 0
      %p138 = por %p136, %p137
      %p139 = scmp.le.s32.totalorder 1, %s14
      %p140 = scmp.lt.s32.totalorder %s14, 5
      %p141 = pnand %p139, %p140
      %p142 = pneg %p141
      // Predicated region
      $region9: #{tpu_custom_call.1} parent=5 // pred_check
        _
      $region10: #{tpu_custom_call.1} parent=5 // pred_check_branch
        %144 = sbr.rel (%p141) target = $region12
      $region11: #{tpu_custom_call.1} parent=5 // pred_region
        %s145 = ssub.s32 %s14, 1
      $region12: #{tpu_custom_call.1} parent=5 // pred_fallthru
        _
      %p146 = scmp.lt.s32.totalorder %s14, 4
      // Predicated region
      $region13: #{tpu_custom_call.1} parent=5 // pred_check
        %p147 = pneg %p146
      $region14: #{tpu_custom_call.1} parent=5 // pred_check_branch
        %149 = sbr.rel (%p147) target = $region16
      $region15: #{tpu_custom_call.1} parent=5 // pred_region
        // Predicated region
        $region17: #{tpu_custom_call.1} parent=15 // pred_check
          %p150 = pneg %p61
        $region18: #{tpu_custom_call.1} parent=15 // pred_check_branch
          %152 = sbr.rel (%p150) target = $region20
        $region19: #{tpu_custom_call.1} parent=15 // pred_region
          %s153 = sand.u32 %s51, 1
          %s154 = scalar_lea.sflag [#allocation3], %s153
          %s155 = sand.u32 %s51, 1
          %s156 = smul.addr %s155, 32
          %s157 = scalar_lea.vmem [#allocation2], %s156
          %s158 = sadd.s32 %s22, %s23
          %p159 = scmp.lt.s32.totalorder %s158, 0
          %s160 = scalar_select %p159, %s158, 0
          %s161 = smul.u32 4, %s160
          %s163 = ssub.s32 512, 512
          %164 = vsyncadd %s154, %s163
          %s165 = smul.addr %s21, 4
          %s166 = sadd.s32 %s161, %s165
          %s167 = smul.addr %s166, 128
          %s168 = scalar_lea.hbm %s0, %s167
          %s170 = sshll.u32 %s157, 4
          %s171 = int_to_ptr.vmem [resolvable:$true] %s170
          %173 = dma.hbm_to_vmem [thread:$0]  %s168, 512, %s171, %s154
        $region20: #{tpu_custom_call.1} parent=15 // pred_fallthru
          _
        // Predicated region
        $region21: #{tpu_custom_call.1} parent=15 // pred_check
          %p174 = pneg %p95
        $region22: #{tpu_custom_call.1} parent=15 // pred_check_branch
          %176 = sbr.rel (%p174) target = $region24
        $region23: #{tpu_custom_call.1} parent=15 // pred_region
          %s177 = sand.u32 %s85, 1
          %s178 = scalar_lea.sflag [#allocation5], %s177
          %s179 = sand.u32 %s85, 1
          %s180 = smul.addr %s179, 4
          %s181 = scalar_lea.vmem [#allocation4], %s180
          %s182 = sadd.s32 %s22, %s23
          %p183 = scmp.lt.s32.totalorder %s182, 0
          %s184 = scalar_select %p183, %s182, 0
          %s185 = smul.u32 4, %s184
          %s187 = ssub.s32 64, 64
          %188 = vsyncadd %s178, %s187
          %s189 = smul.addr %s21, 4
          %s190 = sadd.s32 %s185, %s189
          %s191 = smul.addr %s190, 16
          %s192 = scalar_lea.hbm %s1, %s191
          %s194 = sshll.u32 %s181, 4
          %s195 = int_to_ptr.vmem [resolvable:$true] %s194
          %197 = dma.hbm_to_vmem [thread:$0]  %s192, 64, %s195, %s178
        $region24: #{tpu_custom_call.1} parent=15 // pred_fallthru
          _
      $region16: #{tpu_custom_call.1} parent=5 // pred_fallthru
        _
      %p198 = scmp.le.s32.totalorder 1, %s14
      %p199 = scmp.lt.s32.totalorder %s14, 5
      %p200 = pnand %p198, %p199
      %p201 = pneg %p200
      // Predicated region
      $region25: #{tpu_custom_call.1} parent=5 // pred_check
        _
      $region26: #{tpu_custom_call.1} parent=5 // pred_check_branch
        %203 = sbr.rel (%p200) target = $region28
      $region27: #{tpu_custom_call.1} parent=5 // pred_region
        %s204 = ssub.s32 %s14, 1
        %s205 = sand.u32 %s54, 1
        %s206 = scalar_lea.sflag [#allocation3], %s205
        %s207 = sand.u32 %s54, 1
        %s208 = smul.addr %s207, 32
        %s209 = scalar_lea.vmem [#allocation2], %s208
        // Predicated region
        $region29: #{tpu_custom_call.1} parent=27 // pred_check
          %p210 = pneg %p67
        $region30: #{tpu_custom_call.1} parent=27 // pred_check_branch
          %212 = sbr.rel (%p210) target = $region32
        $region31: #{tpu_custom_call.1} parent=27 // pred_region
          %213 = dma.done %s206, 512
        $region32: #{tpu_custom_call.1} parent=27 // pred_fallthru
          _
        %s214 = sand.u32 %s88, 1
        %s215 = scalar_lea.sflag [#allocation5], %s214
        %s216 = sand.u32 %s88, 1
        %s217 = smul.addr %s216, 4
        %s218 = scalar_lea.vmem [#allocation4], %s217
        // Predicated region
        $region33: #{tpu_custom_call.1} parent=27 // pred_check
          %p219 = pneg %p101
        $region34: #{tpu_custom_call.1} parent=27 // pred_check_branch
          %221 = sbr.rel (%p219) target = $region36
        $region35: #{tpu_custom_call.1} parent=27 // pred_region
          %222 = dma.done %s215, 64
        $region36: #{tpu_custom_call.1} parent=27 // pred_fallthru
          _
        %s223 = sand.u32 %s54, 1
        %s224 = scalar_lea.sflag [#allocation3], %s223
        %s225 = sand.u32 %s54, 1
        %s226 = smul.addr %s225, 32
        %s227 = scalar_lea.vmem [#allocation2], %s226
        %p228 = pneg %p67
        %p229 = pneg %p64
        %s230 = sand.u32 %s88, 1
        %s231 = scalar_lea.sflag [#allocation5], %s230
        %s232 = sand.u32 %s88, 1
        %s233 = smul.addr %s232, 4
        %s234 = scalar_lea.vmem [#allocation4], %s233
        %p235 = pneg %p101
        %p236 = pneg %p98
        %p237 = pneg %p131
        %p238 = pneg %p128
        %s239 = smul.u32 %s24, 2
        %s240 = sadd.s32 %s239, %s25
        %p241 = scmp.lt.s32.totalorder %s240, 3
        %s242 = scalar_select %p241, %s240, 3
        %s243 = smul.addr %s242, 8
        %s244 = scalar_lea.vmem %s2, %s243
        %s245 = sadd.s32 %s25, %s26
        %p246 = scmp.lt.s32.totalorder %s245, 0
        %s247 = scalar_select %p246, %s245, 0
        %s248 = smul.u32 4, %s247
        %s249 = sadd.s32 %s25, %s26
        %p250 = scmp.lt.s32.totalorder %s249, 0
        %s251 = scalar_select %p250, %s249, 0
        %s252 = smul.u32 4, %s251
        %s253 = smul.u32 %s24, 2
        %s254 = sadd.s32 %s253, %s25
        %p255 = scmp.lt.s32.totalorder %s254, 3
        %s256 = scalar_select %p255, %s254, 3
        %s257 = smul.addr %s256, 8
        %s258 = scalar_lea.vmem %s2, %s257
        %s259 = smul.u32 %s24, 2
        %s260 = sadd.s32 %s259, %s25
        %v261 = vld [vmem:[%s209] sm:$0xff]
        %v262 = vld [vmem:[%s209 + $0x8] sm:$0xff]
        %v263 = vld [vmem:[%s209 + $0x10] sm:$0xff]
        %v264 = vld [vmem:[%s209 + $0x18] sm:$0xff]
        %v265 = vld [vmem:[%s218] sm:$0xf]
        %v266 = vrot.slane %v261, 4
        %v267 = vmax.f32 %v261, %v266
        %v268 = vrot.slane %v267, 2
        %v269 = vmax.f32 %v267, %v268
        %v270 = vrot.slane %v269, 1
        %v271 = vmax.f32 %v269, %v270
        %v272 = vrot.slane %v262, 4
        %v273 = vmax.f32 %v262, %v272
        %v274 = vrot.slane %v273, 2
        %v275 = vmax.f32 %v273, %v274
        %v276 = vrot.slane %v275, 1
        %v277 = vmax.f32 %v275, %v276
        %v278 = vrot.slane %v263, 4
        %v279 = vmax.f32 %v263, %v278
        %v280 = vrot.slane %v279, 2
        %v281 = vmax.f32 %v279, %v280
        %v282 = vrot.slane %v281, 1
        %v283 = vmax.f32 %v281, %v282
        %v284 = vrot.slane %v264, 4
        %v285 = vmax.f32 %v264, %v284
        %v286 = vrot.slane %v285, 2
        %v287 = vmax.f32 %v285, %v286
        %v288 = vrot.slane %v287, 1
        %v289 = vmax.f32 %v287, %v288
        %v290 = vsub.f32 %v261, %v271
        %v291 = vsub.f32 %v262, %v277
        %v292 = vsub.f32 %v263, %v283
        %v293 = vsub.f32 %v264, %v289
        %v294 = vmul.f32 %v290, 1.442695
        %v295 = vpow.pop %v294
        %v296 = vmul.f32 %v291, 1.442695
        %v297 = vpow.pop %v296
        %v298 = vmul.f32 %v292, 1.442695
        %v299 = vpow.pop %v298
        %v300 = vmul.f32 %v293, 1.442695
        %v301 = vpow.pop %v300
        %v302 = vrot.slane %v295, 4
        %v303 = vadd.f32 %v295, %v302
        %v304 = vrot.slane %v303, 2
        %v305 = vadd.f32 %v303, %v304
        %v306 = vrot.slane %v305, 1
        %v307 = vadd.f32 %v305, %v306
        %v308 = vrot.slane %v297, 4
        %v309 = vadd.f32 %v297, %v308
        %v310 = vrot.slane %v309, 2
        %v311 = vadd.f32 %v309, %v310
        %v312 = vrot.slane %v311, 1
        %v313 = vadd.f32 %v311, %v312
        %v314 = vrot.slane %v299, 4
        %v315 = vadd.f32 %v299, %v314
        %v316 = vrot.slane %v315, 2
        %v317 = vadd.f32 %v315, %v316
        %v318 = vrot.slane %v317, 1
        %v319 = vadd.f32 %v317, %v318
        %v320 = vrot.slane %v301, 4
        %v321 = vadd.f32 %v301, %v320
        %v322 = vrot.slane %v321, 2
        %v323 = vadd.f32 %v321, %v322
        %v324 = vrot.slane %v323, 1
        %v325 = vadd.f32 %v323, %v324
        %v326 = vrcp.pop %v307
        %v327 = vrcp.pop %v313
        %v328 = vrcp.pop %v319
        %v329 = vrcp.pop %v325
        %v330 = vmul.f32 %v295, %v326
        %v331 = vmul.f32 %v297, %v327
        %v332 = vmul.f32 %v299, %v328
        %v333 = vmul.f32 %v301, %v329
        %v334 = vlog2.pop %v307
        %v335 = vmul.f32 %v334, 0.6931472
        %v336 = vlog2.pop %v313
        %v337 = vmul.f32 %v336, 0.6931472
        %v338 = vlog2.pop %v319
        %v339 = vmul.f32 %v338, 0.6931472
        %v340 = vlog2.pop %v325
        %v341 = vmul.f32 %v340, 0.6931472
        %s342 = sadd.s32 %s25, %s26
        %v343 = vlaneseq
        %v344 = vand.u32 %v343, 127
        %v345 = vadd.s32 %v344, 128
        %v346 = vadd.s32 %v344, 256
        %v347 = vadd.s32 %v344, 384
        %s348 = smul.u32 %s342, 512
        %v349 = vstv %s348
        %v350 = vadd.s32 %v349, %v344
        %v351 = vadd.s32 %v349, %v345
        %v352 = vadd.s32 %v349, %v346
        %v353 = vadd.s32 %v349, %v347
        %vm354 = vcmp.lt.s32.totalorder %v350, 400
        %vm355 = vcmp.lt.s32.totalorder %v351, 400
        %vm356 = vcmp.lt.s32.totalorder %v352, 400
        %vm357 = vcmp.lt.s32.totalorder %v353, 400
        %v358 = vlaneseq
        %v359 = vshrl.u32 %v358, 7
        %v360 = vsub.s32 0, %v359
        %v361 = vrot.slane %v265, %v360
        %v362 = vlaneseq
        %v363 = vshrl.u32 %v362, 7
        %v364 = vsub.s32 1, %v363
        %v365 = vrot.slane %v265, %v364
        %v366 = vlaneseq
        %v367 = vshrl.u32 %v366, 7
        %v368 = vsub.s32 2, %v367
        %v369 = vrot.slane %v265, %v368
        %v370 = vlaneseq
        %v371 = vshrl.u32 %v370, 7
        %v372 = vsub.s32 3, %v371
        %v373 = vrot.slane %v265, %v372
        %v374 = vsel %vm354, %v361, 4294967295
        %v375 = vsel %vm355, %v365, 4294967295
        %v376 = vsel %vm356, %v369, 4294967295
        %v377 = vsel %vm357, %v373, 4294967295
        %v378 = vlaneseq
        %v379 = vshrl.u32 %v378, 7
        %v380 = vlaneseq
        %v381 = vshrl.u32 %v380, 7
        %v382 = vsub.s32 0, %v381
        %v383 = vrot.slane %v374, %v382
        %v384 = vlaneseq
        %v385 = vshrl.u32 %v384, 7
        %v386 = vsub.s32 0, %v385
        %v387 = vrot.slane %v375, %v386
        %v388 = vlaneseq
        %v389 = vshrl.u32 %v388, 7
        %v390 = vsub.s32 0, %v389
        %v391 = vrot.slane %v376, %v390
        %v392 = vlaneseq
        %v393 = vshrl.u32 %v392, 7
        %v394 = vsub.s32 0, %v393
        %v395 = vrot.slane %v377, %v394
        %vm396 = vcmp.eq.s32.totalorder %v379, %v383
        %vm397 = vcmp.eq.s32.totalorder %v379, %v387
        %vm398 = vcmp.eq.s32.totalorder %v379, %v391
        %vm399 = vcmp.eq.s32.totalorder %v379, %v395
        %v400 = vsub.f32 %v335, %v290
        %v401 = vsub.f32 %v337, %v291
        %v402 = vsub.f32 %v339, %v292
        %v403 = vsub.f32 %v341, %v293
        %v404 = vsel %vm396, %v400, 0.0
        %v405 = vsel %vm397, %v401, 0.0
        %v406 = vsel %vm398, %v402, 0.0
        %v407 = vsel %vm399, %v403, 0.0
        %v408 = vadd.f32 %v404, %v405
        %v409 = vadd.f32 %v408, %v406
        %v410 = vadd.f32 %v409, %v407
        %411 = vadd.xlane.f32.xlu0 %v410
        %v412 = vpop.xlane.xlu0 %411
        %v413 = vsel %vm396, 1.0, 0.0
        %v414 = vsel %vm397, 1.0, 0.0
        %v415 = vsel %vm398, 1.0, 0.0
        %v416 = vsel %vm399, 1.0, 0.0
        %v417 = vadd.f32 %v413, %v414
        %v418 = vadd.f32 %v417, %v415
        %v419 = vadd.f32 %v418, %v416
        %420 = vadd.xlane.f32.xlu0 %v419
        %v421 = vpop.xlane.xlu0 %420
        %v422 = vsel %vm396, %v330, 0.0
        %v423 = vsel %vm397, %v331, 0.0
        %v424 = vsel %vm398, %v332, 0.0
        %v425 = vsel %vm399, %v333, 0.0
        %v426 = vadd.f32 %v422, %v423
        %v427 = vadd.f32 %v426, %v424
        %v428 = vadd.f32 %v427, %v425
        %429 = vadd.xlane.f32.xlu0 %v428
        %v430 = vpop.xlane.xlu0 %429
        %v431 = vsel %vm354, 1, 0
        %v432 = vsel %vm355, 1, 0
        %v433 = vsel %vm356, 1, 0
        %v434 = vsel %vm357, 1, 0
        %vm435 = vcmp.eq.s32.totalorder %v431, 1
        %vm436 = vcmp.eq.s32.totalorder %v432, 1
        %vm437 = vcmp.eq.s32.totalorder %v433, 1
        %vm438 = vcmp.eq.s32.totalorder %v434, 1
        %v439 = vsel %vm435, %v330, 0.0
        %v440 = vsel %vm436, %v331, 0.0
        %v441 = vsel %vm437, %v332, 0.0
        %v442 = vsel %vm438, %v333, 0.0
        %v443 = vadd.f32 %v439, %v440
        %v444 = vadd.f32 %v443, %v441
        %v445 = vadd.f32 %v444, %v442
        %446 = vadd.xlane.f32.xlu0 %v445
        %v447 = vpop.xlane.xlu0 %446
        %p448 = scmp.eq.s32.totalorder %s26, 0
        // Predicated region
        $region37: #{tpu_custom_call.1} parent=27 // pred_check
          %p449 = pneg %p448
        $region38: #{tpu_custom_call.1} parent=27 // pred_check_branch
          %451 = sbr.rel (%p449) target = $region40
        $region39: #{tpu_custom_call.1} parent=27 // pred_region
          %vm452 = vcmask 31744
          %453 = vst.msk [vmem:[%s258] sm:$0xff] %vm452, 0.0
        $region40: #{tpu_custom_call.1} parent=27 // pred_fallthru
          _
        %v454 = vld [vmem:[%s258] sm:$0xff]
        %v455 = vadd.f32 %v454, %v412
        %vm456 = vcmask 7168
        %457 = vst.msk [vmem:[%s258] sm:$0xff] %vm456, %v455
        %v458 = vld [vmem:[%s258] sm:$0xff]
        %v459 = vadd.f32 %v458, %v421
        %vm460 = vcmask 15368
        %461 = vst.msk [vmem:[%s258] sm:$0xff] %vm460, %v459
        %v462 = vld [vmem:[%s258] sm:$0xff]
        %v463 = vadd.f32 %v462, %v430
        %vm464 = vcmask 23568
        %465 = vst.msk [vmem:[%s258] sm:$0xff] %vm464, %v463
        %v466 = vld [vmem:[%s258] sm:$0xff]
        %v467 = vadd.f32 %v466, %v447
        %vm468 = vcmask 31768
        %469 = vst.msk [vmem:[%s258] sm:$0xff] %vm468, %v467
        %s470 = smul.u32 %s24, 2
        %s471 = sadd.s32 %s470, %s25
        %p472 = scmp.lt.s32.totalorder %s471, 3
        %s473 = scalar_select %p472, %s471, 3
        %s474 = smul.addr %s473, 8
        %s475 = scalar_lea.vmem %s2, %s474
        // Predicated region
        $region41: #{tpu_custom_call.1} parent=27 // pred_check
          %p476 = pneg %p128
        $region42: #{tpu_custom_call.1} parent=27 // pred_check_branch
          %478 = sbr.rel (%p476) target = $region44
        $region43: #{tpu_custom_call.1} parent=27 // pred_region
          %s479 = smul.u32 %s24, 2
          %s480 = sadd.s32 %s479, %s25
        $region44: #{tpu_custom_call.1} parent=27 // pred_fallthru
          _
      $region28: #{tpu_custom_call.1} parent=5 // pred_fallthru
        _
      %p481 = scmp.le.s32.totalorder 2, %s14
      // Predicated region
      $region45: #{tpu_custom_call.1} parent=5 // pred_check
        %p482 = pneg %p481
      $region46: #{tpu_custom_call.1} parent=5 // pred_check_branch
        %484 = sbr.rel (%p482) target = $region48
      $region47: #{tpu_custom_call.1} parent=5 // pred_region
        %s485 = ssub.s32 %s14, 2
        // Predicated region
        $region49: #{tpu_custom_call.1} parent=47 // pred_check
          %p486 = pneg %p134
        $region50: #{tpu_custom_call.1} parent=47 // pred_check_branch
          %488 = sbr.rel (%p486) target = $region52
        $region51: #{tpu_custom_call.1} parent=47 // pred_region
          %s489 = smul.u32 %s27, 2
          %s490 = sadd.s32 %s489, %s28
          %p491 = scmp.lt.s32.totalorder %s490, 3
          %s492 = scalar_select %p491, %s490, 3
          %s493 = smul.addr %s492, 8
          %s494 = scalar_lea.vmem %s2, %s493
        $region52: #{tpu_custom_call.1} parent=47 // pred_fallthru
          _
      $region48: #{tpu_custom_call.1} parent=5 // pred_fallthru
        _
    $region6: #{tpu_custom_call.1} parent=1 // loop_footer
      %s18 = sadd.s32 1, %s14
    $region7: #{tpu_custom_call.1} parent=1 // loop_footer_branch
      %13 = sbr.rel target = $region3
    $region8: #{tpu_custom_call.1} parent=1 // loop_exit
      _
    %495 = vsyncpa [#allocation3], 1
    %s496 = scalar_lea.sflag [#allocation3], 1
    %497 = vsyncpa %s496, 1
    %498 = vsyncpa [#allocation5], 1
    %s499 = scalar_lea.sflag [#allocation5], 1
    %500 = vsyncpa %s499, 1

</llo_original>
